<compile_context>
chip_gen: v5e
topology: v5e:2x2
jax: 0.10.0
libtpu: 0.0.40
codegen_flags: <defaults>
</compile_context>

<pallas_src>
import functools
import math

import jax
import jax.numpy as jnp
from jax.experimental import pallas as pl
from jax.experimental.pallas import tpu as pltpu

BN_EPS = 1e-5
NEG_INF = -1e30


# ----------------------------------------------------------------------------
# Tiling helpers (ResNet shapes here are powers of two, so these give exact
# coverage without padding; the full-dim fallback keeps arbitrary shapes legal).
# ----------------------------------------------------------------------------
def _pick_tm(m):
    for tm in (256, 128, 64, 32, 16, 8):
        if m % tm == 0:
            return tm
    return m            # full-dim block (always a legal block shape)


def _pick_tn(m, n):
    # Wide 256-lane N tiles when M is large (fills the v6e/v7x MXU) or when M
    # is tiny (late layers: fewer grid steps, per-step overhead dominates).
    if n % 256 == 0 and (m >= 256 or m <= 64):
        return 256
    if n % 128 == 0:
        return 128
    return n            # n = 64 / 12 style cases: full-dim block, no padding


def _pick_tk(k):
    if k % 128 != 0 or k <= 1536:
        return k        # single K step, full-dim block
    for tk in (1152, 1024, 768, 512, 384, 256, 128):
        if k % tk == 0:
            return tk
    return k


# ----------------------------------------------------------------------------
# Pallas kernels
# ----------------------------------------------------------------------------
def _matmul_bn_kernel(a_ref, b_ref, s_ref, t_ref, *rest, relu, has_res):
    """acc += a @ b over the K grid axis; epilogue: *scale + shift (+res)(+ReLU)."""
    if has_res:
        res_ref, o_ref, acc_ref = rest
    else:
        res_ref = None
        o_ref, acc_ref = rest

    @pl.when(pl.program_id(2) == 0)
    def _():
        acc_ref[...] = jnp.zeros_like(acc_ref)

    acc_ref[...] += jnp.dot(a_ref[...], b_ref[...],
                            preferred_element_type=jnp.float32)

    @pl.when(pl.program_id(2) == pl.num_programs(2) - 1)
    def _():
        y = acc_ref[...] * s_ref[...] + t_ref[...]
        if has_res:
            y = y + res_ref[...].astype(jnp.float32)
        if relu:
            y = jnp.maximum(y, 0.0)
        o_ref[...] = y.astype(o_ref.dtype)


def _max_taps_kernel(w_ref, o_ref):
    # w_ref: (9, tm, C) -- the 9 taps of a 3x3 pooling window; elementwise max.
    o_ref[...] = jnp.max(w_ref[...], axis=0)


def _gap_fc_kernel(x_ref, w_ref, b_ref, o_ref):
    # x_ref: (Nb, H*W, C) -> mean over spatial, then tiny FC matmul (f32).
    feats = jnp.mean(x_ref[...].astype(jnp.float32), axis=1)
    o_ref[...] = jnp.dot(feats, w_ref[...],
                         preferred_element_type=jnp.float32) + b_ref[...]


# ----------------------------------------------------------------------------
# Pallas wrappers
# ----------------------------------------------------------------------------
def matmul_bn(a, b, scale, shift, *, relu=False, residual=None,
              out_dtype=jnp.bfloat16):
    """(M,K)@(K,N) in bf16 on the MXU, f32 accumulation, fused BN affine /
    optional residual add / ReLU epilogue.  No activation padding/slicing."""
    M, K = a.shape
    Kb, N = b.shape
    assert K == Kb
    a = a.astype(jnp.bfloat16)
    b = b.astype(jnp.bfloat16)
    s = scale.reshape(1, N).astype(jnp.float32)
    t = shift.reshape(1, N).astype(jnp.float32)

    tm, tn, tk = _pick_tm(M), _pick_tn(M, N), _pick_tk(K)
    grid = (M // tm, N // tn, K // tk)

    in_specs = [
        pl.BlockSpec((tm, tk), lambda i, j, k: (i, k)),
        pl.BlockSpec((tk, tn), lambda i, j, k: (k, j)),
        pl.BlockSpec((1, tn), lambda i, j, k: (0, j)),
        pl.BlockSpec((1, tn), lambda i, j, k: (0, j)),
    ]
    args = [a, b, s, t]
    has_res = residual is not None
    if has_res:
        in_specs.append(pl.BlockSpec((tm, tn), lambda i, j, k: (i, j)))
        args.append(residual.reshape(M, N).astype(jnp.bfloat16))

    # modest scoped-VMEM request (v7x only has 64 MiB per TensorCore)
    blk_bytes = ((tm * tk + tk * tn) * 2 + 2 * tn * 4
                 + tm * tn * (2 + (2 if has_res else 0)) + tm * tn * 4)
    vmem_limit = int(min(48 * 1024 * 1024, max(16 * 1024 * 1024, 4 * blk_bytes)))

    return pl.pallas_call(
        functools.partial(_matmul_bn_kernel, relu=relu, has_res=has_res),
        out_shape=jax.ShapeDtypeStruct((M, N), out_dtype),
        grid=grid,
        in_specs=in_specs,
        out_specs=pl.BlockSpec((tm, tn), lambda i, j, k: (i, j)),
        scratch_shapes=[pltpu.VMEM((tm, tn), jnp.float32)],
        compiler_params=pltpu.CompilerParams(
            dimension_semantics=("parallel", "parallel", "arbitrary"),
            vmem_limit_bytes=vmem_limit,
        ),
    )(*args)


def max_pool_3x3_s2_p1(x):
    """MaxPool2d(kernel=3, stride=2, padding=1) on an NHWC tensor."""
    N, H, W, C = x.shape
    Ho = (H + 2 - 3) // 2 + 1
    Wo = (W + 2 - 3) // 2 + 1
    xp = jnp.pad(x, ((0, 0), (1, 1), (1, 1), (0, 0)), constant_values=NEG_INF)
    # TODO(synk): compute the 9-way max from shifted windows inside the kernel
    # (overlapping stride-2 windows are awkward with Blocked specs); the tap
    # stack is built by XLA, but the max itself is gridded + pipelined.
    taps = [xp[:, i:i + 2 * Ho:2, j:j + 2 * Wo:2, :]
            for i in range(3) for j in range(3)]
    M = N * Ho * Wo
    wins = jnp.stack(taps, axis=0).reshape(9, M, C)
    tm = _pick_tm(M)
    out = pl.pallas_call(
        _max_taps_kernel,
        out_shape=jax.ShapeDtypeStruct((M, C), x.dtype),
        grid=(M // tm,),
        in_specs=[pl.BlockSpec((9, tm, C), lambda i: (0, i, 0))],
        out_specs=pl.BlockSpec((tm, C), lambda i: (i, 0)),
        compiler_params=pltpu.CompilerParams(
            dimension_semantics=("parallel",)),
    )(wins)
    return out.reshape(N, Ho, Wo, C)


def gap_fc(x, w_pad, b_pad, num_classes):
    """Fused AdaptiveAvgPool2d((1,1)) + flatten + Linear(512, num_classes)."""
    N, H, W, C = x.shape
    Np = w_pad.shape[1]
    Nb = max(8, ((N + 7) // 8) * 8)       # align the tiny matmul's row dim
    x2 = jnp.zeros((Nb, H * W, C), x.dtype).at[:N].set(x.reshape(N, H * W, C))
    # TODO(synk): tile over batch for very large N; a single block is fine here.
    out = pl.pallas_call(
        _gap_fc_kernel,
        out_shape=jax.ShapeDtypeStruct((Nb, Np), jnp.float32),
    )(x2, w_pad, b_pad)
    return out[:N, :num_classes]


# ----------------------------------------------------------------------------
# Conv / BN glue (im2col is plain-JAX data movement; the matmul is Pallas)
# ----------------------------------------------------------------------------
def _im2col(x, kh, kw, stride, pad):
    # TODO(synk): replace with in-kernel tap accumulation (K-grid over kh*kw)
    # to avoid the 9x/49x activation expansion in HBM.
    N, H, W, C = x.shape
    Ho = (H + 2 * pad - kh) // stride + 1
    Wo = (W + 2 * pad - kw) // stride + 1
    if pad:
        x = jnp.pad(x, ((0, 0), (pad, pad), (pad, pad), (0, 0)))
    if kh == 1 and kw == 1:
        cols = x[:, ::stride, ::stride, :]
        return cols.reshape(N * Ho * Wo, C), (N, Ho, Wo)
    taps = [x[:, i:i + stride * Ho:stride, j:j + stride * Wo:stride, :]
            for i in range(kh) for j in range(kw)]
    cols = jnp.stack(taps, axis=3)                       # (N, Ho, Wo, kh*kw, C)
    return cols.reshape(N * Ho * Wo, kh * kw * C), (N, Ho, Wo)


def conv_bn(x, prep, k, stride, pad, *, relu, residual=None):
    cols, (N, Ho, Wo) = _im2col(x, k, k, stride, pad)
    y = matmul_bn(cols, prep["w"], prep["scale"], prep["shift"],
                  relu=relu, residual=residual)
    return y.reshape(N, Ho, Wo, prep["w"].shape[1])


# ----------------------------------------------------------------------------
# Parameter initialisation (deterministic, PyTorch-shaped) + preparation
# ----------------------------------------------------------------------------
def _xavier_uniform(key, shape, fan_in, fan_out):
    bound = math.sqrt(6.0 / (fan_in + fan_out))
    return jax.random.uniform(key, shape, jnp.float32, -bound, bound)


def _init_conv(key, kh, kw, cin, cout):
    return _xavier_uniform(key, (kh, kw, cin, cout), cin * kh * kw, cout * kh * kw)


def _init_bn(c):
    return dict(gamma=jnp.ones((c,), jnp.float32),
                beta=jnp.zeros((c,), jnp.float32),
                mean=jnp.zeros((c,), jnp.float32),
                var=jnp.ones((c,), jnp.float32))


def _init_block(key, cin, cout, downsample):
    k = jax.random.split(key, 3)
    p = dict(conv1=_init_conv(k[0], 3, 3, cin, cout), bn1=_init_bn(cout),
             conv2=_init_conv(k[1], 3, 3, cout, cout), bn2=_init_bn(cout))
    if downsample:
        p["down_conv"] = _init_conv(k[2], 1, 1, cin, cout)
        p["down_bn"] = _init_bn(cout)
    return p


def init_resnet18_sup_params(key, num_classes=12):
    keys = jax.random.split(key, 16)
    params = dict(conv1=_init_conv(keys[0], 7, 7, 3, 64), bn1=_init_bn(64))
    widths = [64, 128, 256, 512]
    cin = 64
    ki = 1
    for li, cout in enumerate(widths, start=1):
        downsample = (cout != cin)       # layer1: no downsample; layers 2-4: 1x1/s2
        params[f"layer{li}"] = [
            _init_block(keys[ki], cin, cout, downsample),
            _init_block(keys[ki + 1], cout, cout, False),
        ]
        ki += 2
        cin = cout
    params["fc_w"] = _xavier_uniform(keys[ki], (512, num_classes), 512, num_classes)
    b_bound = 1.0 / math.sqrt(512.0)
    params["fc_b"] = jax.random.uniform(keys[ki + 1], (num_classes,), jnp.float32,
                                        -b_bound, b_bound)
    return params


def _fold_bn(bn):
    scale = bn["gamma"] / jnp.sqrt(bn["var"] + BN_EPS)
    shift = bn["beta"] - bn["mean"] * scale
    return scale, shift


def _prep_conv_bn(w_hwio, bn):
    kh, kw, cin, cout = w_hwio.shape
    scale, shift = _fold_bn(bn)
    return dict(w=w_hwio.reshape(kh * kw * cin, cout).astype(jnp.bfloat16),
                scale=scale.reshape(1, cout).astype(jnp.float32),
                shift=shift.reshape(1, cout).astype(jnp.float32))


def prepare_params(params, num_classes):
    """Fold BN, reshape / cast conv weights to bf16 matrices, pad the classifier
    weights once -- hoisted out of the forward path."""
    prep = dict(conv1=_prep_conv_bn(params["conv1"], params["bn1"]))
    for li in range(1, 5):
        blocks = []
        for bp in params[f"layer{li}"]:
            blk = dict(conv1=_prep_conv_bn(bp["conv1"], bp["bn1"]),
                       conv2=_prep_conv_bn(bp["conv2"], bp["bn2"]))
            if "down_conv" in bp:
                blk["down"] = _prep_conv_bn(bp["down_conv"], bp["down_bn"])
            blocks.append(blk)
        prep[f"layer{li}"] = blocks
    c = params["fc_w"].shape[0]
    np_ = ((num_classes + 127) // 128) * 128
    prep["fc_w"] = jnp.zeros((c, np_), jnp.float32).at[:, :num_classes].set(params["fc_w"])
    prep["fc_b"] = jnp.zeros((1, np_), jnp.float32).at[0, :num_classes].set(params["fc_b"])
    return prep


# ----------------------------------------------------------------------------
# Forward pass
# ----------------------------------------------------------------------------
def _basic_block(x, prep, stride):
    if "down" in prep:
        identity = conv_bn(x, prep["down"], 1, stride, 0, relu=False)
    else:
        identity = x
    out = conv_bn(x, prep["conv1"], 3, stride, 1, relu=True)
    # residual add + ReLU fused into conv2's matmul epilogue
    out = conv_bn(out, prep["conv2"], 3, 1, 1, relu=True, residual=identity)
    return out


def resnet18_sup_forward(prep, x_nchw, num_classes):
    x = jnp.transpose(x_nchw, (0, 2, 3, 1)).astype(jnp.bfloat16)   # NCHW -> NHWC
    x = conv_bn(x, prep["conv1"], 7, 2, 3, relu=True)
    x = max_pool_3x3_s2_p1(x)
    for li, stride in ((1, 1), (2, 2), (3, 2), (4, 2)):
        b0, b1 = prep[f"layer{li}"]
        x = _basic_block(x, b0, stride)
        x = _basic_block(x, b1, 1)
    return gap_fc(x, prep["fc_w"], prep["fc_b"], num_classes)       # (N, num_classes)


if __name__ == "__main__":
    key = jax.random.PRNGKey(0)
    pkey, xkey = jax.random.split(key)
    num_classes = 12
    params = init_resnet18_sup_params(pkey, num_classes=num_classes)
    prep = prepare_params(params, num_classes)
    x = jax.random.normal(xkey, (2, 3, 64, 64), jnp.float32)        # NCHW, like PyTorch

    # sanity check: Pallas conv-as-matmul (bf16 MXU, f32 acc) vs lax.conv on the stem.
    @jax.jit
    def _stem_check(x_nchw):
        x_nhwc = jnp.transpose(x_nchw, (0, 2, 3, 1))
        ours = conv_bn(x_nhwc.astype(jnp.bfloat16), prep["conv1"], 7, 2, 3, relu=True)
        scale, shift = _fold_bn(params["bn1"])
        x_r = x_nhwc.astype(jnp.bfloat16).astype(jnp.float32)
        w_r = params["conv1"].astype(jnp.bfloat16).astype(jnp.float32)
        ref = jax.lax.conv_general_dilated(
            x_r, w_r, window_strides=(2, 2), padding=((3, 3), (3, 3)),
            dimension_numbers=("NHWC", "HWIO", "NHWC"))
        ref = jnp.maximum(ref * scale + shift, 0.0)
        return jnp.max(jnp.abs(ours.astype(jnp.float32) - ref))

    err = float(jax.block_until_ready(_stem_check(x)))
    assert err < 1e-1, f"stem conv mismatch: {err}"

    fwd = jax.jit(functools.partial(resnet18_sup_forward, num_classes=num_classes))
    logits = jax.block_until_ready(fwd(prep, x))
    assert logits.shape == (2, num_classes)
    assert bool(jnp.all(jnp.isfinite(logits)))
    print("KERNEL_OK")
</pallas_src>

<mosaic_0001>
module attributes {stable_mosaic.version = 11 : i64} {
  func.func @_matmul_bn_kernel(%arg0: i32, %arg1: i32, %arg2: i32, %arg3: memref<256x147xbf16, #tpu.memory_space<vmem>>, %arg4: memref<147x64xbf16, #tpu.memory_space<vmem>>, %arg5: memref<1x64xf32, #tpu.memory_space<vmem>>, %arg6: memref<1x64xf32, #tpu.memory_space<vmem>>, %arg7: memref<256x64xbf16, #tpu.memory_space<vmem>>, %arg8: memref<256x64xf32, #tpu.memory_space<vmem>>) attributes {dimension_semantics = [#tpu.dimension_semantics<parallel>, #tpu.dimension_semantics<parallel>, #tpu.dimension_semantics<arbitrary>], iteration_bounds = array<i64: 8, 1, 1>, scalar_prefetch = 0 : i64, scratch_operands = 1 : i64, tpu.core_type = #tpu.core_type<tc>, window_params = [{transform_indices = @transform_0, window_bounds = array<i64: 256, 147>}, {transform_indices = @transform_1, window_bounds = array<i64: 147, 64>}, {transform_indices = @transform_2, window_bounds = array<i64: 1, 64>}, {transform_indices = @transform_3, window_bounds = array<i64: 1, 64>}, {transform_indices = @transform_4, window_bounds = array<i64: 256, 64>}]} {
    %c0_i32 = arith.constant 0 : i32
    %0 = arith.cmpi eq, %arg2, %c0_i32 : i32
    %1 = arith.extui %0 : i1 to i32
    %c0_i32_0 = arith.constant 0 : i32
    %2 = arith.cmpi ne, %1, %c0_i32_0 : i32
    scf.if %2 {
      %cst_10 = arith.constant 0.000000e+00 : f32
      %12 = vector.broadcast %cst_10 : f32 to vector<256x64xf32>
      %c0_11 = arith.constant 0 : index
      %c0_12 = arith.constant 0 : index
      %13 = vector.load %arg8[%c0_11, %c0_12] : memref<256x64xf32, #tpu.memory_space<vmem>>, vector<256x64xf32>
      tpu.vector_store %arg8[%c0_11, %c0_12], %12 {strides = array<i32>} : memref<256x64xf32, #tpu.memory_space<vmem>>, vector<256x64xf32>,
    } else {
    }
    %c0 = arith.constant 0 : index
    %c0_1 = arith.constant 0 : index
    %3 = vector.load %arg8[%c0, %c0_1] : memref<256x64xf32, #tpu.memory_space<vmem>>, vector<256x64xf32>
    %c0_2 = arith.constant 0 : index
    %c0_3 = arith.constant 0 : index
    %4 = vector.load %arg3[%c0_2, %c0_3] : memref<256x147xbf16, #tpu.memory_space<vmem>>, vector<256x147xbf16>
    %c0_4 = arith.constant 0 : index
    %c0_5 = arith.constant 0 : index
    %5 = vector.load %arg4[%c0_4, %c0_5] : memref<147x64xbf16, #tpu.memory_space<vmem>>, vector<147x64xbf16>
    %cst = arith.constant dense<0.000000e+00> : vector<256x64xf32>
    %6 = tpu.matmul %4, %5, %cst {dimension_numbers = #tpu.dot_dimension_numbers<[1], [0], [0], [1], [0, 0, 1, 1], [], []>} : vector<256x147xbf16>, vector<147x64xbf16>, vector<256x64xf32> -> vector<256x64xf32>
    %7 = arith.addf %3, %6 : vector<256x64xf32>
    %c0_6 = arith.constant 0 : index
    %c0_7 = arith.constant 0 : index
    %8 = vector.load %arg8[%c0_6, %c0_7] : memref<256x64xf32, #tpu.memory_space<vmem>>, vector<256x64xf32>
    tpu.vector_store %arg8[%c0_6, %c0_7], %7 {strides = array<i32>} : memref<256x64xf32, #tpu.memory_space<vmem>>, vector<256x64xf32>,
    %c0_i32_8 = arith.constant 0 : i32
    %9 = arith.cmpi eq, %arg2, %c0_i32_8 : i32
    %10 = arith.extui %9 : i1 to i32
    %c0_i32_9 = arith.constant 0 : i32
    %11 = arith.cmpi ne, %10, %c0_i32_9 : i32
    scf.if %11 {
      %c0_10 = arith.constant 0 : index
      %c0_11 = arith.constant 0 : index
      %12 = vector.load %arg8[%c0_10, %c0_11] : memref<256x64xf32, #tpu.memory_space<vmem>>, vector<256x64xf32>
      %c0_12 = arith.constant 0 : index
      %c0_13 = arith.constant 0 : index
      %13 = vector.load %arg5[%c0_12, %c0_13] : memref<1x64xf32, #tpu.memory_space<vmem>>, vector<1x64xf32>
      %14 = vector.broadcast %13 : vector<1x64xf32> to vector<256x64xf32>
      %15 = arith.mulf %12, %14 : vector<256x64xf32>
      %c0_14 = arith.constant 0 : index
      %c0_15 = arith.constant 0 : index
      %16 = vector.load %arg6[%c0_14, %c0_15] : memref<1x64xf32, #tpu.memory_space<vmem>>, vector<1x64xf32>
      %17 = vector.broadcast %16 : vector<1x64xf32> to vector<256x64xf32>
      %18 = arith.addf %15, %17 : vector<256x64xf32>
      %cst_16 = arith.constant 0.000000e+00 : f32
      %19 = vector.broadcast %cst_16 : f32 to vector<256x64xf32>
      %20 = arith.maximumf %18, %19 : vector<256x64xf32>
      %21 = arith.truncf %20 : vector<256x64xf32> to vector<256x64xbf16>
      %c0_17 = arith.constant 0 : index
      %c0_18 = arith.constant 0 : index
      %22 = vector.load %arg7[%c0_17, %c0_18] : memref<256x64xbf16, #tpu.memory_space<vmem>>, vector<256x64xbf16>
      tpu.vector_store %arg7[%c0_17, %c0_18], %21 {strides = array<i32>} : memref<256x64xbf16, #tpu.memory_space<vmem>>, vector<256x64xbf16>,
    } else {
    }
    return
  }
  func.func @transform_0(%arg0: i32, %arg1: i32, %arg2: i32) -> (i32, i32) {
    %c0_i32 = arith.constant 0 : i32
    return %arg0, %arg2 : i32, i32
  }
  func.func @transform_1(%arg0: i32, %arg1: i32, %arg2: i32) -> (i32, i32) {
    %c0_i32 = arith.constant 0 : i32
    return %arg2, %arg1 : i32, i32
  }
  func.func @transform_2(%arg0: i32, %arg1: i32, %arg2: i32) -> (i32, i32) {
    %c0_i32 = arith.constant 0 : i32
    %c0_i32_0 = arith.constant 0 : i32
    return %c0_i32, %arg1 : i32, i32
  }
  func.func @transform_3(%arg0: i32, %arg1: i32, %arg2: i32) -> (i32, i32) {
    %c0_i32 = arith.constant 0 : i32
    %c0_i32_0 = arith.constant 0 : i32
    return %c0_i32, %arg1 : i32, i32
  }
  func.func @transform_4(%arg0: i32, %arg1: i32, %arg2: i32) -> (i32, i32) {
    %c0_i32 = arith.constant 0 : i32
    return %arg0, %arg1 : i32, i32
  }
}

</mosaic_0001>

<llo_original>
// kernel: _stem_check.1
$region0: #{_stem_check.1}
  #allocation0 [shape = 'u32[]', space=smem, size = 0x4, offset = 0x4, fixed_abs, tag = 'smem constant byte address 0x4 - core index']
  #allocation1 [shape = 'u32[72,128]{1,0:T(1,128)}', space=vmem, size = 0x9000, scoped, tag = 'internal scratch']
  #allocation2 [shape = 'f32[256,64]{1,0:T(8,128)}', space=vmem, size = 0x20000, scoped, tag = 'scratch operand']
  %s0 = inlined_call_operand.vmem [shape: bf16[2048,147], index: 0, kind: input, shape index: {}]
  %s1 = inlined_call_operand.vmem [shape: bf16[147,64], index: 1, kind: input, shape index: {}]
  %s2 = inlined_call_operand.vmem [shape: f32[1,64], index: 2, kind: input, shape index: {}]
  %s3 = inlined_call_operand.vmem [shape: f32[1,64], index: 3, kind: input, shape index: {}]
  %s4 = inlined_call_operand.vmem [shape: bf16[2048,64], index: 4, kind: output, shape index: {}]
  %s5 = sld [smem:[#allocation0]]
  $region57: #{_stem_check.1} parent=0
    _
  %s7 = ssub.s32 1, %s5
  %s8 = scalar_select 0, %s7, %s5
  loop: start=0, step=1, limit=10
  $region2: #{_stem_check.1} parent=0 // loop_pre_header
    _
  $region3: #{_stem_check.1} parent=0 // loop_header
    %s10 = sphi 0, %s14
    %p11 = scmp.ge.s32.totalorder %s10, 10
    %s17 = sphi 0, %s36
    %s18 = sphi 0, %s32
    %s19 = sphi 0, %s28
    %s20 = sphi 0, %s17
    %s21 = sphi 0, %s18
    %s22 = sphi 0, %s19
    %s23 = sphi 0, %s20
    %s24 = sphi 0, %s21
    %s25 = sphi 0, %s22
    %s41 = sphi 0, %s43
    %s44 = sphi 0, %s41
    %s45 = sphi 0, %s44
    %s61 = sphi 0, %s45
    %s69 = sphi 0, %s71
    %s72 = sphi 0, %s69
    %s73 = sphi 0, %s72
    %s89 = sphi 0, %s73
    %s95 = sphi 0, %s97
    %s98 = sphi 0, %s95
    %s99 = sphi 0, %s98
    %s115 = sphi 0, %s99
    %s121 = sphi 0, %s123
    %s124 = sphi 0, %s121
    %s125 = sphi 0, %s124
    %s141 = sphi 0, %s125
    %s149 = sphi 0, %s151
    %s152 = sphi 0, %s149
    %s153 = sphi 0, %s152
    %s169 = sphi 0, %s153
  $region4: #{_stem_check.1} parent=0 // loop_header_branch
    %13 = sbr.rel (%p11) target = $region8
  $region5: #{_stem_check.1} parent=0 // loop_body
    %s15 = ssub.s32 %s10, 1
    %s16 = ssub.s32 %s10, 2
    %s26 = sadd.s32 1, %s19
    %p27 = scmp.ge.s32.totalorder %s26, 1
    %s28 = scalar_select %p27, 0, %s26
    %s29 = sadd.s32 1, %s18
    %s30 = scalar_select %p27, %s29, %s18
    %p31 = scmp.ge.s32.totalorder %s30, 1
    %s32 = scalar_select %p31, 0, %s30
    %s33 = sadd.s32 1, %s17
    %s34 = scalar_select %p31, %s33, %s17
    %p35 = scmp.ge.s32.totalorder %s34, 8
    %s36 = scalar_select %p35, 0, %s34
    %s37 = ssub.s32 %s17, %s36
    %s38 = ssub.s32 %s19, %s28
    %s39 = sor.u32 %s37, %s38
    %p40 = scmp.eq.s32.totalorder %s39, 0
    %s42 = sadd.s32 %s41, 1
    %s43 = scalar_select %p40, %s41, %s42
    %p46 = pneg %p40
    %p47 = scmp.eq.s32.totalorder %s10, 7
    %p48 = por %p46, %p47
    %p49 = scmp.ne.s32.totalorder %s41, %s44
    %p50 = scmp.eq.s32.totalorder %s10, 0
    %p51 = por %p49, %p50
    %p52 = scmp.ne.s32.totalorder %s41, %s44
    %p53 = scmp.eq.s32.totalorder %s15, 7
    %p54 = por %p52, %p53
    %p55 = scmp.ne.s32.totalorder %s44, %s45
    %p56 = scmp.eq.s32.totalorder %s15, 0
    %p57 = por %p55, %p56
    %p58 = scmp.ne.s32.totalorder %s44, %s45
    %p59 = scmp.eq.s32.totalorder %s16, 7
    %p60 = por %p58, %p59
    %p62 = scmp.ne.s32.totalorder %s45, %s61
    %p63 = scmp.eq.s32.totalorder %s16, 0
    %p64 = por %p62, %p63
    %s65 = ssub.s32 %s19, %s28
    %s66 = ssub.s32 %s18, %s32
    %s67 = sor.u32 %s65, %s66
    %p68 = scmp.eq.s32.totalorder %s67, 0
    %s70 = sadd.s32 %s69, 1
    %s71 = scalar_select %p68, %s69, %s70
    %p74 = pneg %p68
    %p75 = scmp.eq.s32.totalorder %s10, 7
    %p76 = por %p74, %p75
    %p77 = scmp.ne.s32.totalorder %s69, %s72
    %p78 = scmp.eq.s32.totalorder %s10, 0
    %p79 = por %p77, %p78
    %p80 = scmp.ne.s32.totalorder %s69, %s72
    %p81 = scmp.eq.s32.totalorder %s15, 7
    %p82 = por %p80, %p81
    %p83 = scmp.ne.s32.totalorder %s72, %s73
    %p84 = scmp.eq.s32.totalorder %s15, 0
    %p85 = por %p83, %p84
    %p86 = scmp.ne.s32.totalorder %s72, %s73
    %p87 = scmp.eq.s32.totalorder %s16, 7
    %p88 = por %p86, %p87
    %p90 = scmp.ne.s32.totalorder %s73, %s89
    %p91 = scmp.eq.s32.totalorder %s16, 0
    %p92 = por %p90, %p91
    %s93 = ssub.s32 %s18, %s32
    %p94 = scmp.eq.s32.totalorder %s93, 0
    %s96 = sadd.s32 %s95, 1
    %s97 = scalar_select %p94, %s95, %s96
    %p100 = pneg %p94
    %p101 = scmp.eq.s32.totalorder %s10, 7
    %p102 = por %p100, %p101
    %p103 = scmp.ne.s32.totalorder %s95, %s98
    %p104 = scmp.eq.s32.totalorder %s10, 0
    %p105 = por %p103, %p104
    %p106 = scmp.ne.s32.totalorder %s95, %s98
    %p107 = scmp.eq.s32.totalorder %s15, 7
    %p108 = por %p106, %p107
    %p109 = scmp.ne.s32.totalorder %s98, %s99
    %p110 = scmp.eq.s32.totalorder %s15, 0
    %p111 = por %p109, %p110
    %p112 = scmp.ne.s32.totalorder %s98, %s99
    %p113 = scmp.eq.s32.totalorder %s16, 7
    %p114 = por %p112, %p113
    %p116 = scmp.ne.s32.totalorder %s99, %s115
    %p117 = scmp.eq.s32.totalorder %s16, 0
    %p118 = por %p116, %p117
    %s119 = ssub.s32 %s18, %s32
    %p120 = scmp.eq.s32.totalorder %s119, 0
    %s122 = sadd.s32 %s121, 1
    %s123 = scalar_select %p120, %s121, %s122
    %p126 = pneg %p120
    %p127 = scmp.eq.s32.totalorder %s10, 7
    %p128 = por %p126, %p127
    %p129 = scmp.ne.s32.totalorder %s121, %s124
    %p130 = scmp.eq.s32.totalorder %s10, 0
    %p131 = por %p129, %p130
    %p132 = scmp.ne.s32.totalorder %s121, %s124
    %p133 = scmp.eq.s32.totalorder %s15, 7
    %p134 = por %p132, %p133
    %p135 = scmp.ne.s32.totalorder %s124, %s125
    %p136 = scmp.eq.s32.totalorder %s15, 0
    %p137 = por %p135, %p136
    %p138 = scmp.ne.s32.totalorder %s124, %s125
    %p139 = scmp.eq.s32.totalorder %s16, 7
    %p140 = por %p138, %p139
    %p142 = scmp.ne.s32.totalorder %s125, %s141
    %p143 = scmp.eq.s32.totalorder %s16, 0
    %p144 = por %p142, %p143
    %s145 = ssub.s32 %s17, %s36
    %s146 = ssub.s32 %s18, %s32
    %s147 = sor.u32 %s145, %s146
    %p148 = scmp.eq.s32.totalorder %s147, 0
    %s150 = sadd.s32 %s149, 1
    %s151 = scalar_select %p148, %s149, %s150
    %p154 = pneg %p148
    %p155 = scmp.eq.s32.totalorder %s10, 7
    %p156 = por %p154, %p155
    %p157 = scmp.ne.s32.totalorder %s149, %s152
    %p158 = scmp.eq.s32.totalorder %s10, 0
    %p159 = por %p157, %p158
    %p160 = scmp.ne.s32.totalorder %s149, %s152
    %p161 = scmp.eq.s32.totalorder %s15, 7
    %p162 = por %p160, %p161
    %p163 = scmp.ne.s32.totalorder %s152, %s153
    %p164 = scmp.eq.s32.totalorder %s15, 0
    %p165 = por %p163, %p164
    %p166 = scmp.ne.s32.totalorder %s152, %s153
    %p167 = scmp.eq.s32.totalorder %s16, 7
    %p168 = por %p166, %p167
    %p170 = scmp.ne.s32.totalorder %s153, %s169
    %p171 = scmp.eq.s32.totalorder %s16, 0
    %p172 = por %p170, %p171
    %p173 = scmp.le.s32.totalorder 1, %s10
    %p174 = scmp.lt.s32.totalorder %s10, 9
    %p175 = pnand %p173, %p174
    %p176 = pneg %p175
    // Predicated region
    $region9: #{_stem_check.1} parent=5 // pred_check
      _
    $region10: #{_stem_check.1} parent=5 // pred_check_branch
      %178 = sbr.rel (%p175) target = $region12
    $region11: #{_stem_check.1} parent=5 // pred_region
      %s179 = ssub.s32 %s10, 1
      // Predicated region
      $region13: #{_stem_check.1} parent=11 // pred_check
        %p180 = pneg %p85
      $region14: #{_stem_check.1} parent=11 // pred_check_branch
        %182 = sbr.rel (%p180) target = $region16
      $region15: #{_stem_check.1} parent=11 // pred_region
        %s183 = smul.u32 19, %s22
        %p184 = scmp.lt.s32.totalorder %s183, 18
        %s185 = scalar_select %p184, %s183, 18
        %p186 = scmp.lt.s32.totalorder %s21, 0
        %s187 = scalar_select %p186, %s21, 0
        %s188 = sadd.s32 %s187, %s185
        %s189 = smul.addr %s188, 4
        %s190 = scalar_lea.vmem %s1, %s189
        %s191 = smul.u32 19, %s22
      $region16: #{_stem_check.1} parent=11 // pred_fallthru
        _
      // Predicated region
      $region17: #{_stem_check.1} parent=11 // pred_check
        %p192 = pneg %p111
      $region18: #{_stem_check.1} parent=11 // pred_check_branch
        %194 = sbr.rel (%p192) target = $region20
      $region19: #{_stem_check.1} parent=11 // pred_region
        %p195 = scmp.lt.s32.totalorder %s21, 0
        %s196 = scalar_select %p195, %s21, 0
        %s197 = scalar_lea.vmem %s2, %s196
      $region20: #{_stem_check.1} parent=11 // pred_fallthru
        _
      // Predicated region
      $region21: #{_stem_check.1} parent=11 // pred_check
        %p198 = pneg %p137
      $region22: #{_stem_check.1} parent=11 // pred_check_branch
        %200 = sbr.rel (%p198) target = $region24
      $region23: #{_stem_check.1} parent=11 // pred_region
        %p201 = scmp.lt.s32.totalorder %s21, 0
        %s202 = scalar_select %p201, %s21, 0
        %s203 = scalar_lea.vmem %s3, %s202
      $region24: #{_stem_check.1} parent=11 // pred_fallthru
        _
    $region12: #{_stem_check.1} parent=5 // pred_fallthru
      _
    %p204 = scmp.lt.s32.totalorder %s10, 8
    // Predicated region
    $region25: #{_stem_check.1} parent=5 // pred_check
      %p205 = pneg %p204
    $region26: #{_stem_check.1} parent=5 // pred_check_branch
      %207 = sbr.rel (%p205) target = $region28
    $region27: #{_stem_check.1} parent=5 // pred_region
      // Predicated region
      $region29: #{_stem_check.1} parent=27 // pred_check
        %p208 = pneg %p51
      $region30: #{_stem_check.1} parent=27 // pred_check_branch
        %210 = sbr.rel (%p208) target = $region32
      $region31: #{_stem_check.1} parent=27 // pred_region
        %s211 = smul.u32 32, %s17
        %s212 = smul.u32 2, %s19
        %p213 = scmp.lt.s32.totalorder %s211, 255
        %s214 = scalar_select %p213, %s211, 255
        %p215 = scmp.lt.s32.totalorder %s212, 1
        %s216 = scalar_select %p215, %s212, 1
        %s217 = smul.addr %s214, 2
        %s218 = sadd.s32 %s216, %s217
        %s219 = smul.addr %s218, 4
        %s220 = scalar_lea.vmem %s0, %s219
        %s221 = smul.u32 32, %s17
        %s222 = smul.u32 2, %s19
      $region32: #{_stem_check.1} parent=27 // pred_fallthru
        _
    $region28: #{_stem_check.1} parent=5 // pred_fallthru
      _
    %p223 = scmp.le.s32.totalorder 1, %s10
    %p224 = scmp.lt.s32.totalorder %s10, 9
    %p225 = pnand %p223, %p224
    %p226 = pneg %p225
    // Predicated region
    $region33: #{_stem_check.1} parent=5 // pred_check
      _
    $region34: #{_stem_check.1} parent=5 // pred_check_branch
      %228 = sbr.rel (%p225) target = $region36
    $region35: #{_stem_check.1} parent=5 // pred_region
      %s229 = ssub.s32 %s10, 1
      %s230 = smul.u32 32, %s20
      %s231 = smul.u32 2, %s22
      %p232 = scmp.lt.s32.totalorder %s230, 255
      %s233 = scalar_select %p232, %s230, 255
      %p234 = scmp.lt.s32.totalorder %s231, 1
      %s235 = scalar_select %p234, %s231, 1
      %s236 = smul.addr %s233, 2
      %s237 = sadd.s32 %s235, %s236
      %s238 = smul.addr %s237, 4
      %s239 = scalar_lea.vmem %s0, %s238
      %p240 = pneg %p57
      %p241 = pneg %p54
      %s242 = smul.u32 19, %s22
      %p243 = scmp.lt.s32.totalorder %s242, 18
      %s244 = scalar_select %p243, %s242, 18
      %p245 = scmp.lt.s32.totalorder %s21, 0
      %s246 = scalar_select %p245, %s21, 0
      %s247 = sadd.s32 %s246, %s244
      %s248 = smul.addr %s247, 4
      %s249 = scalar_lea.vmem %s1, %s248
      %p250 = pneg %p85
      %p251 = pneg %p82
      %p252 = scmp.lt.s32.totalorder %s21, 0
      %s253 = scalar_select %p252, %s21, 0
      %s254 = scalar_lea.vmem %s2, %s253
      %p255 = pneg %p111
      %p256 = pneg %p108
      %p257 = scmp.lt.s32.totalorder %s21, 0
      %s258 = scalar_select %p257, %s21, 0
      %s259 = scalar_lea.vmem %s3, %s258
      %p260 = pneg %p137
      %p261 = pneg %p134
      %p262 = pneg %p165
      %p263 = pneg %p162
      %s264 = smul.u32 32, %s20
      %p265 = scmp.lt.s32.totalorder %s264, 255
      %s266 = scalar_select %p265, %s264, 255
      %p267 = scmp.lt.s32.totalorder %s21, 0
      %s268 = scalar_select %p267, %s21, 0
      %s269 = sadd.s32 %s268, %s266
      %s270 = smul.addr %s269, 4
      %s271 = scalar_lea.vmem %s4, %s270
      %s272 = smul.u32 32, %s20
      %s273 = smul.u32 2, %s22
      %p274 = scmp.lt.s32.totalorder %s272, 255
      %s275 = scalar_select %p274, %s272, 255
      %p276 = scmp.lt.s32.totalorder %s273, 1
      %s277 = scalar_select %p276, %s273, 1
      %s278 = smul.addr %s275, 2
      %s279 = sadd.s32 %s277, %s278
      %s280 = smul.addr %s279, 4
      %s281 = scalar_lea.vmem %s0, %s280
      %s282 = smul.u32 32, %s20
      %s283 = smul.u32 2, %s22
      %s284 = smul.u32 19, %s22
      %p285 = scmp.lt.s32.totalorder %s284, 18
      %s286 = scalar_select %p285, %s284, 18
      %p287 = scmp.lt.s32.totalorder %s21, 0
      %s288 = scalar_select %p287, %s21, 0
      %s289 = sadd.s32 %s288, %s286
      %s290 = smul.addr %s289, 4
      %s291 = scalar_lea.vmem %s1, %s290
      %s292 = smul.u32 19, %s22
      %p293 = scmp.lt.s32.totalorder %s21, 0
      %s294 = scalar_select %p293, %s21, 0
      %s295 = scalar_lea.vmem %s2, %s294
      %p296 = scmp.lt.s32.totalorder %s21, 0
      %s297 = scalar_select %p296, %s21, 0
      %s298 = scalar_lea.vmem %s3, %s297
      %s299 = smul.u32 32, %s20
      %p300 = scmp.lt.s32.totalorder %s299, 255
      %s301 = scalar_select %p300, %s299, 255
      %p302 = scmp.lt.s32.totalorder %s21, 0
      %s303 = scalar_select %p302, %s21, 0
      %s304 = sadd.s32 %s303, %s301
      %s305 = smul.addr %s304, 4
      %s306 = scalar_lea.vmem %s4, %s305
      %s307 = smul.u32 32, %s20
      %p309 = scmp.eq.s32.totalorder %s22, 0
      // Predicated region
      $region37: #{_stem_check.1} parent=35 // pred_check
        %p310 = pneg %p309
      $region38: #{_stem_check.1} parent=35 // pred_check_branch
        %312 = sbr.rel (%p310) target = $region40
      $region39: #{_stem_check.1} parent=35 // pred_region
        %vm313 = vcmask 523264
        %314 = vst.msk [vmem:[#allocation2] sm:$0xff] %vm313, 0.0
        %315 = vst.msk [vmem:[#allocation2 + $0x8] sm:$0xff] %vm313, 0.0
        %316 = vst.msk [vmem:[#allocation2 + $0x10] sm:$0xff] %vm313, 0.0
        %317 = vst.msk [vmem:[#allocation2 + $0x18] sm:$0xff] %vm313, 0.0
        %318 = vst.msk [vmem:[#allocation2 + $0x20] sm:$0xff] %vm313, 0.0
        %319 = vst.msk [vmem:[#allocation2 + $0x28] sm:$0xff] %vm313, 0.0
        %320 = vst.msk [vmem:[#allocation2 + $0x30] sm:$0xff] %vm313, 0.0
        %321 = vst.msk [vmem:[#allocation2 + $0x38] sm:$0xff] %vm313, 0.0
        %322 = vst.msk [vmem:[#allocation2 + $0x40] sm:$0xff] %vm313, 0.0
        %323 = vst.msk [vmem:[#allocation2 + $0x48] sm:$0xff] %vm313, 0.0
        %324 = vst.msk [vmem:[#allocation2 + $0x50] sm:$0xff] %vm313, 0.0
        %325 = vst.msk [vmem:[#allocation2 + $0x58] sm:$0xff] %vm313, 0.0
        %326 = vst.msk [vmem:[#allocation2 + $0x60] sm:$0xff] %vm313, 0.0
        %327 = vst.msk [vmem:[#allocation2 + $0x68] sm:$0xff] %vm313, 0.0
        %328 = vst.msk [vmem:[#allocation2 + $0x70] sm:$0xff] %vm313, 0.0
        %329 = vst.msk [vmem:[#allocation2 + $0x78] sm:$0xff] %vm313, 0.0
        %330 = vst.msk [vmem:[#allocation2 + $0x80] sm:$0xff] %vm313, 0.0
        %331 = vst.msk [vmem:[#allocation2 + $0x88] sm:$0xff] %vm313, 0.0
        %332 = vst.msk [vmem:[#allocation2 + $0x90] sm:$0xff] %vm313, 0.0
        %333 = vst.msk [vmem:[#allocation2 + $0x98] sm:$0xff] %vm313, 0.0
        %334 = vst.msk [vmem:[#allocation2 + $0xa0] sm:$0xff] %vm313, 0.0
        %335 = vst.msk [vmem:[#allocation2 + $0xa8] sm:$0xff] %vm313, 0.0
        %336 = vst.msk [vmem:[#allocation2 + $0xb0] sm:$0xff] %vm313, 0.0
        %337 = vst.msk [vmem:[#allocation2 + $0xb8] sm:$0xff] %vm313, 0.0
        %338 = vst.msk [vmem:[#allocation2 + $0xc0] sm:$0xff] %vm313, 0.0
        %339 = vst.msk [vmem:[#allocation2 + $0xc8] sm:$0xff] %vm313, 0.0
        %340 = vst.msk [vmem:[#allocation2 + $0xd0] sm:$0xff] %vm313, 0.0
        %341 = vst.msk [vmem:[#allocation2 + $0xd8] sm:$0xff] %vm313, 0.0
        %342 = vst.msk [vmem:[#allocation2 + $0xe0] sm:$0xff] %vm313, 0.0
        %343 = vst.msk [vmem:[#allocation2 + $0xe8] sm:$0xff] %vm313, 0.0
        %344 = vst.msk [vmem:[#allocation2 + $0xf0] sm:$0xff] %vm313, 0.0
        %345 = vst.msk [vmem:[#allocation2 + $0xf8] sm:$0xff] %vm313, 0.0
      $region40: #{_stem_check.1} parent=35 // pred_fallthru
        _
      %v346 = vld [vmem:[#allocation2] sm:$0xff]
      %v347 = vld [vmem:[#allocation2 + $0x8] sm:$0xff]
      %v348 = vld [vmem:[#allocation2 + $0x10] sm:$0xff]
      %v349 = vld [vmem:[#allocation2 + $0x18] sm:$0xff]
      %v350 = vld [vmem:[#allocation2 + $0x20] sm:$0xff]
      %v351 = vld [vmem:[#allocation2 + $0x28] sm:$0xff]
      %v352 = vld [vmem:[#allocation2 + $0x30] sm:$0xff]
      %v353 = vld [vmem:[#allocation2 + $0x38] sm:$0xff]
      %v354 = vld [vmem:[#allocation2 + $0x40] sm:$0xff]
      %v355 = vld [vmem:[#allocation2 + $0x48] sm:$0xff]
      %v356 = vld [vmem:[#allocation2 + $0x50] sm:$0xff]
      %v357 = vld [vmem:[#allocation2 + $0x58] sm:$0xff]
      %v358 = vld [vmem:[#allocation2 + $0x60] sm:$0xff]
      %v359 = vld [vmem:[#allocation2 + $0x68] sm:$0xff]
      %v360 = vld [vmem:[#allocation2 + $0x70] sm:$0xff]
      %v361 = vld [vmem:[#allocation2 + $0x78] sm:$0xff]
      %v362 = vld [vmem:[#allocation2 + $0x80] sm:$0xff]
      %v363 = vld [vmem:[#allocation2 + $0x88] sm:$0xff]
      %v364 = vld [vmem:[#allocation2 + $0x90] sm:$0xff]
      %v365 = vld [vmem:[#allocation2 + $0x98] sm:$0xff]
      %v366 = vld [vmem:[#allocation2 + $0xa0] sm:$0xff]
      %v367 = vld [vmem:[#allocation2 + $0xa8] sm:$0xff]
      %v368 = vld [vmem:[#allocation2 + $0xb0] sm:$0xff]
      %v369 = vld [vmem:[#allocation2 + $0xb8] sm:$0xff]
      %v370 = vld [vmem:[#allocation2 + $0xc0] sm:$0xff]
      %v371 = vld [vmem:[#allocation2 + $0xc8] sm:$0xff]
      %v372 = vld [vmem:[#allocation2 + $0xd0] sm:$0xff]
      %v373 = vld [vmem:[#allocation2 + $0xd8] sm:$0xff]
      %v374 = vld [vmem:[#allocation2 + $0xe0] sm:$0xff]
      %v375 = vld [vmem:[#allocation2 + $0xe8] sm:$0xff]
      %v376 = vld [vmem:[#allocation2 + $0xf0] sm:$0xff]
      %v377 = vld [vmem:[#allocation2 + $0xf8] sm:$0xff]
      %v378 = vld [vmem:[%s281] sm:$0xff]
      %v379 = vld [vmem:[%s281 + $0x8] sm:$0xff]
      %v380 = vld [vmem:[%s281 + $0x10] sm:$0xff]
      %v381 = vld [vmem:[%s281 + $0x18] sm:$0xff]
      %v382 = vld [vmem:[%s281 + $0x20] sm:$0xff]
      %v383 = vld [vmem:[%s281 + $0x28] sm:$0xff]
      %v384 = vld [vmem:[%s281 + $0x30] sm:$0xff]
      %v385 = vld [vmem:[%s281 + $0x38] sm:$0xff]
      %v386 = vld [vmem:[%s281 + $0x40] sm:$0xff]
      %v387 = vld [vmem:[%s281 + $0x48] sm:$0xff]
      %v388 = vld [vmem:[%s281 + $0x50] sm:$0xff]
      %v389 = vld [vmem:[%s281 + $0x58] sm:$0xff]
      %v390 = vld [vmem:[%s281 + $0x60] sm:$0xff]
      %v391 = vld [vmem:[%s281 + $0x68] sm:$0xff]
      %v392 = vld [vmem:[%s281 + $0x70] sm:$0xff]
      %v393 = vld [vmem:[%s281 + $0x78] sm:$0xff]
      %v394 = vld [vmem:[%s281 + $0x80] sm:$0xff]
      %v395 = vld [vmem:[%s281 + $0x88] sm:$0xff]
      %v396 = vld [vmem:[%s281 + $0x90] sm:$0xff]
      %v397 = vld [vmem:[%s281 + $0x98] sm:$0xff]
      %v398 = vld [vmem:[%s281 + $0xa0] sm:$0xff]
      %v399 = vld [vmem:[%s281 + $0xa8] sm:$0xff]
      %v400 = vld [vmem:[%s281 + $0xb0] sm:$0xff]
      %v401 = vld [vmem:[%s281 + $0xb8] sm:$0xff]
      %v402 = vld [vmem:[%s281 + $0xc0] sm:$0xff]
      %v403 = vld [vmem:[%s281 + $0xc8] sm:$0xff]
      %v404 = vld [vmem:[%s281 + $0xd0] sm:$0xff]
      %v405 = vld [vmem:[%s281 + $0xd8] sm:$0xff]
      %v406 = vld [vmem:[%s281 + $0xe0] sm:$0xff]
      %v407 = vld [vmem:[%s281 + $0xe8] sm:$0xff]
      %v408 = vld [vmem:[%s281 + $0xf0] sm:$0xff]
      %v409 = vld [vmem:[%s281 + $0xf8] sm:$0xff]
      %v410 = vld [vmem:[%s291] sm:$0xf]
      %v411 = vld [vmem:[%s291 + $0x4] sm:$0xf]
      %v412 = vld [vmem:[%s291 + $0x8] sm:$0xf]
      %v413 = vld [vmem:[%s291 + $0xc] sm:$0xf]
      %v414 = vld [vmem:[%s291 + $0x10] sm:$0xf]
      %v415 = vld [vmem:[%s291 + $0x14] sm:$0xf]
      %v416 = vld [vmem:[%s291 + $0x18] sm:$0xf]
      %v417 = vld [vmem:[%s291 + $0x1c] sm:$0xf]
      %v418 = vld [vmem:[%s291 + $0x20] sm:$0xf]
      %v419 = vld [vmem:[%s291 + $0x24] sm:$0xf]
      %v420 = vld [vmem:[%s291 + $0x28] sm:$0xf]
      %v421 = vld [vmem:[%s291 + $0x2c] sm:$0xf]
      %v422 = vld [vmem:[%s291 + $0x30] sm:$0xf]
      %v423 = vld [vmem:[%s291 + $0x34] sm:$0xf]
      %v424 = vld [vmem:[%s291 + $0x38] sm:$0xf]
      %v425 = vld [vmem:[%s291 + $0x3c] sm:$0xf]
      %v426 = vld [vmem:[%s291 + $0x40] sm:$0xf]
      %v427 = vld [vmem:[%s291 + $0x44] sm:$0xf]
      %v428 = vld [vmem:[%s291 + $0x48] sm:$0x3]
      %v461 = vunpack.c.l.b16 %v378
      %v462 = vunpack.c.h.b16 %v378
      %v463 = vunpack.c.l.b16 %v379
      %v464 = vunpack.c.h.b16 %v379
      %v465 = vunpack.c.l.b16 %v380
      %v466 = vunpack.c.h.b16 %v380
      %v467 = vunpack.c.l.b16 %v381
      %v468 = vunpack.c.h.b16 %v381
      %v469 = vunpack.c.l.b16 %v382
      %v470 = vunpack.c.h.b16 %v382
      %v471 = vunpack.c.l.b16 %v383
      %v472 = vunpack.c.h.b16 %v383
      %v473 = vunpack.c.l.b16 %v384
      %v474 = vunpack.c.h.b16 %v384
      %v475 = vunpack.c.l.b16 %v385
      %v476 = vunpack.c.h.b16 %v385
      %v477 = vunpack.c.l.b16 %v386
      %v478 = vunpack.c.h.b16 %v386
      %v479 = vunpack.c.l.b16 %v387
      %v480 = vunpack.c.h.b16 %v387
      %v481 = vunpack.c.l.b16 %v388
      %v482 = vunpack.c.h.b16 %v388
      %v483 = vunpack.c.l.b16 %v389
      %v484 = vunpack.c.h.b16 %v389
      %v485 = vunpack.c.l.b16 %v390
      %v486 = vunpack.c.h.b16 %v390
      %v487 = vunpack.c.l.b16 %v391
      %v488 = vunpack.c.h.b16 %v391
      %v489 = vunpack.c.l.b16 %v392
      %v490 = vunpack.c.h.b16 %v392
      %v491 = vunpack.c.l.b16 %v393
      %v492 = vunpack.c.h.b16 %v393
      %v493 = vunpack.c.l.b16 %v394
      %v494 = vunpack.c.h.b16 %v394
      %v495 = vunpack.c.l.b16 %v395
      %v496 = vunpack.c.h.b16 %v395
      %v497 = vunpack.c.l.b16 %v396
      %v498 = vunpack.c.h.b16 %v396
      %v499 = vunpack.c.l.b16 %v397
      %v500 = vunpack.c.h.b16 %v397
      %v501 = vunpack.c.l.b16 %v398
      %v502 = vunpack.c.h.b16 %v398
      %v503 = vunpack.c.l.b16 %v399
      %v504 = vunpack.c.h.b16 %v399
      %v505 = vunpack.c.l.b16 %v400
      %v506 = vunpack.c.h.b16 %v400
      %v507 = vunpack.c.l.b16 %v401
      %v508 = vunpack.c.h.b16 %v401
      %v509 = vunpack.c.l.b16 %v402
      %v510 = vunpack.c.h.b16 %v402
      %v511 = vunpack.c.l.b16 %v403
      %v512 = vunpack.c.h.b16 %v403
      %v513 = vunpack.c.l.b16 %v404
      %v514 = vunpack.c.h.b16 %v404
      %v515 = vunpack.c.l.b16 %v405
      %v516 = vunpack.c.h.b16 %v405
      %v517 = vunpack.c.l.b16 %v406
      %v518 = vunpack.c.h.b16 %v406
      %v519 = vunpack.c.l.b16 %v407
      %v520 = vunpack.c.h.b16 %v407
      %v521 = vunpack.c.l.b16 %v408
      %v522 = vunpack.c.h.b16 %v408
      %v523 = vunpack.c.l.b16 %v409
      %v524 = vunpack.c.h.b16 %v409
      %v525 = vpack.c.b16 %v463, %v461
      %v526 = vpack.c.b16 %v464, %v462
      %v527 = vpack.c.b16 %v467, %v465
      %v528 = vpack.c.b16 %v468, %v466
      %v529 = vpack.c.b16 %v471, %v469
      %v530 = vpack.c.b16 %v472, %v470
      %v531 = vpack.c.b16 %v475, %v473
      %v532 = vpack.c.b16 %v476, %v474
      %v533 = vpack.c.b16 %v479, %v477
      %v534 = vpack.c.b16 %v480, %v478
      %v535 = vpack.c.b16 %v483, %v481
      %v536 = vpack.c.b16 %v484, %v482
      %v537 = vpack.c.b16 %v487, %v485
      %v538 = vpack.c.b16 %v488, %v486
      %v539 = vpack.c.b16 %v491, %v489
      %v540 = vpack.c.b16 %v492, %v490
      %v541 = vpack.c.b16 %v495, %v493
      %v542 = vpack.c.b16 %v496, %v494
      %v543 = vpack.c.b16 %v499, %v497
      %v544 = vpack.c.b16 %v500, %v498
      %v545 = vpack.c.b16 %v503, %v501
      %v546 = vpack.c.b16 %v504, %v502
      %v547 = vpack.c.b16 %v507, %v505
      %v548 = vpack.c.b16 %v508, %v506
      %v549 = vpack.c.b16 %v511, %v509
      %v550 = vpack.c.b16 %v512, %v510
      %v551 = vpack.c.b16 %v515, %v513
      %v552 = vpack.c.b16 %v516, %v514
      %v553 = vpack.c.b16 %v519, %v517
      %v554 = vpack.c.b16 %v520, %v518
      %v555 = vpack.c.b16 %v523, %v521
      %v556 = vpack.c.b16 %v524, %v522
      %v592 = vunpack.c.l.b16 %v410
      %v593 = vunpack.c.l.b16 %v411
      %v594 = vunpack.c.l.b16 %v412
      %v595 = vunpack.c.l.b16 %v413
      %v596 = vunpack.c.l.b16 %v414
      %v597 = vunpack.c.l.b16 %v415
      %v598 = vunpack.c.l.b16 %v416
      %v599 = vunpack.c.l.b16 %v417
      %v600 = vunpack.c.l.b16 %v418
      %v601 = vunpack.c.l.b16 %v419
      %v602 = vunpack.c.l.b16 %v420
      %v603 = vunpack.c.l.b16 %v421
      %v604 = vunpack.c.l.b16 %v422
      %v605 = vunpack.c.l.b16 %v423
      %v606 = vunpack.c.l.b16 %v424
      %v607 = vunpack.c.l.b16 %v425
      %v608 = vunpack.c.l.b16 %v426
      %v609 = vunpack.c.l.b16 %v427
      %v610 = vunpack.c.l.b16 %v428
      %v611 = vpack.c.b16 %v593, %v592
      %v612 = vpack.c.b16 %v595, %v594
      %v613 = vpack.c.b16 %v597, %v596
      %v614 = vpack.c.b16 %v599, %v598
      %v615 = vpack.c.b16 %v601, %v600
      %v616 = vpack.c.b16 %v603, %v602
      %v617 = vpack.c.b16 %v605, %v604
      %v618 = vpack.c.b16 %v607, %v606
      %v619 = vpack.c.b16 %v609, %v608
      %v620 = vpack.c.b16 %v610, %v610
      %vm630 = vcmask 154624
      %v632 = vsel %vm630, %v526, 0
      %v635 = vsel %vm630, %v528, 0
      %v638 = vsel %vm630, %v530, 0
      %v641 = vsel %vm630, %v532, 0
      %v644 = vsel %vm630, %v534, 0
      %v647 = vsel %vm630, %v536, 0
      %v650 = vsel %vm630, %v538, 0
      %v653 = vsel %vm630, %v540, 0
      %v656 = vsel %vm630, %v542, 0
      %v659 = vsel %vm630, %v544, 0
      %v662 = vsel %vm630, %v546, 0
      %v665 = vsel %vm630, %v548, 0
      %v668 = vsel %vm630, %v550, 0
      %v671 = vsel %vm630, %v552, 0
      %v674 = vsel %vm630, %v554, 0
      %v677 = vsel %vm630, %v556, 0
      %vm679 = vcmask 1040384
      %vm680 = vcmask 1041408
      %v681 = vsel %vm679, 4294967295, 65535
      %v682 = vsel %vm680, %v681, 0
      %v684 = vand.u32 %v620, %v682
      %686 = vmatpush.bf16.msra.mxu0 %v618
      %687 = vmatpush.bf16.msra.mxu0 %v617
      %688 = vmatpush.bf16.msra.mxu0 %v616
      %689 = vmatpush.bf16.msra.mxu0 %v615
      %690 = vmatpush.bf16.msra.mxu0 %v614
      %691 = vmatpush.bf16.msra.mxu0 %v613
      %692 = vmatpush.bf16.msra.mxu0 %v612
      %693 = vmatpush.bf16.msra.mxu0 %v611
      %694 = vmatmul.bf16.gmra.mxu0 %v525
      %v695 = vpop.f32.mrf.mxu0
      %v696 = vadd.f32 0.0, %v695
      %v697 = vpop.f32.mrf.mxu0
      %v698 = vadd.f32 0.0, %v697
      %699 = vmatmul.bf16.gmra.mxu0 %v527
      %v700 = vpop.f32.mrf.mxu0
      %v701 = vadd.f32 0.0, %v700
      %v702 = vpop.f32.mrf.mxu0
      %v703 = vadd.f32 0.0, %v702
      %704 = vmatmul.bf16.gmra.mxu0 %v529
      %v705 = vpop.f32.mrf.mxu0
      %v706 = vadd.f32 0.0, %v705
      %v707 = vpop.f32.mrf.mxu0
      %v708 = vadd.f32 0.0, %v707
      %709 = vmatmul.bf16.gmra.mxu0 %v531
      %v710 = vpop.f32.mrf.mxu0
      %v711 = vadd.f32 0.0, %v710
      %v712 = vpop.f32.mrf.mxu0
      %v713 = vadd.f32 0.0, %v712
      %714 = vmatmul.bf16.gmra.mxu0 %v533
      %v715 = vpop.f32.mrf.mxu0
      %v716 = vadd.f32 0.0, %v715
      %v717 = vpop.f32.mrf.mxu0
      %v718 = vadd.f32 0.0, %v717
      %719 = vmatmul.bf16.gmra.mxu0 %v535
      %v720 = vpop.f32.mrf.mxu0
      %v721 = vadd.f32 0.0, %v720
      %v722 = vpop.f32.mrf.mxu0
      %v723 = vadd.f32 0.0, %v722
      %724 = vmatmul.bf16.gmra.mxu0 %v537
      %v725 = vpop.f32.mrf.mxu0
      %v726 = vadd.f32 0.0, %v725
      %v727 = vpop.f32.mrf.mxu0
      %v728 = vadd.f32 0.0, %v727
      %729 = vmatmul.bf16.gmra.mxu0 %v539
      %v730 = vpop.f32.mrf.mxu0
      %v731 = vadd.f32 0.0, %v730
      %v732 = vpop.f32.mrf.mxu0
      %v733 = vadd.f32 0.0, %v732
      %734 = vmatmul.bf16.gmra.mxu0 %v541
      %v735 = vpop.f32.mrf.mxu0
      %v736 = vadd.f32 0.0, %v735
      %v737 = vpop.f32.mrf.mxu0
      %v738 = vadd.f32 0.0, %v737
      %739 = vmatmul.bf16.gmra.mxu0 %v543
      %v740 = vpop.f32.mrf.mxu0
      %v741 = vadd.f32 0.0, %v740
      %v742 = vpop.f32.mrf.mxu0
      %v743 = vadd.f32 0.0, %v742
      %744 = vmatmul.bf16.gmra.mxu0 %v545
      %v745 = vpop.f32.mrf.mxu0
      %v746 = vadd.f32 0.0, %v745
      %v747 = vpop.f32.mrf.mxu0
      %v748 = vadd.f32 0.0, %v747
      %749 = vmatmul.bf16.gmra.mxu0 %v547
      %v750 = vpop.f32.mrf.mxu0
      %v751 = vadd.f32 0.0, %v750
      %v752 = vpop.f32.mrf.mxu0
      %v753 = vadd.f32 0.0, %v752
      %754 = vmatmul.bf16.gmra.mxu0 %v549
      %v755 = vpop.f32.mrf.mxu0
      %v756 = vadd.f32 0.0, %v755
      %v757 = vpop.f32.mrf.mxu0
      %v758 = vadd.f32 0.0, %v757
      %759 = vmatmul.bf16.gmra.mxu0 %v551
      %v760 = vpop.f32.mrf.mxu0
      %v761 = vadd.f32 0.0, %v760
      %v762 = vpop.f32.mrf.mxu0
      %v763 = vadd.f32 0.0, %v762
      %764 = vmatmul.bf16.gmra.mxu0 %v553
      %v765 = vpop.f32.mrf.mxu0
      %v766 = vadd.f32 0.0, %v765
      %v767 = vpop.f32.mrf.mxu0
      %v768 = vadd.f32 0.0, %v767
      %769 = vmatmul.bf16.gmra.mxu0 %v555
      %v770 = vpop.f32.mrf.mxu0
      %v771 = vadd.f32 0.0, %v770
      %v772 = vpop.f32.mrf.mxu0
      %v773 = vadd.f32 0.0, %v772
      %774 = vdwg.mxu0
      %775 = vmatpush.bf16.msra.mxu0 0
      %776 = vmatpush.bf16.msra.mxu0 0
      %777 = vmatpush.bf16.msra.mxu0 0
      %778 = vmatpush.bf16.msra.mxu0 0
      %779 = vmatpush.bf16.msra.mxu0 0
      %780 = vmatpush.bf16.msra.mxu0 0
      %781 = vmatpush.bf16.msra.mxu0 %v684
      %782 = vmatpush.bf16.msra.mxu0 %v619
      %783 = vmatmul.bf16.gmra.mxu0 %v632
      %v784 = vpop.f32.mrf.mxu0
      %v785 = vadd.f32 %v696, %v784
      %v786 = vpop.f32.mrf.mxu0
      %v787 = vadd.f32 %v698, %v786
      %788 = vmatmul.bf16.gmra.mxu0 %v635
      %v789 = vpop.f32.mrf.mxu0
      %v790 = vadd.f32 %v701, %v789
      %v791 = vpop.f32.mrf.mxu0
      %v792 = vadd.f32 %v703, %v791
      %793 = vmatmul.bf16.gmra.mxu0 %v638
      %v794 = vpop.f32.mrf.mxu0
      %v795 = vadd.f32 %v706, %v794
      %v796 = vpop.f32.mrf.mxu0
      %v797 = vadd.f32 %v708, %v796
      %798 = vmatmul.bf16.gmra.mxu0 %v641
      %v799 = vpop.f32.mrf.mxu0
      %v800 = vadd.f32 %v711, %v799
      %v801 = vpop.f32.mrf.mxu0
      %v802 = vadd.f32 %v713, %v801
      %803 = vmatmul.bf16.gmra.mxu0 %v644
      %v804 = vpop.f32.mrf.mxu0
      %v805 = vadd.f32 %v716, %v804
      %v806 = vpop.f32.mrf.mxu0
      %v807 = vadd.f32 %v718, %v806
      %808 = vmatmul.bf16.gmra.mxu0 %v647
      %v809 = vpop.f32.mrf.mxu0
      %v810 = vadd.f32 %v721, %v809
      %v811 = vpop.f32.mrf.mxu0
      %v812 = vadd.f32 %v723, %v811
      %813 = vmatmul.bf16.gmra.mxu0 %v650
      %v814 = vpop.f32.mrf.mxu0
      %v815 = vadd.f32 %v726, %v814
      %v816 = vpop.f32.mrf.mxu0
      %v817 = vadd.f32 %v728, %v816
      %818 = vmatmul.bf16.gmra.mxu0 %v653
      %v819 = vpop.f32.mrf.mxu0
      %v820 = vadd.f32 %v731, %v819
      %v821 = vpop.f32.mrf.mxu0
      %v822 = vadd.f32 %v733, %v821
      %823 = vmatmul.bf16.gmra.mxu0 %v656
      %v824 = vpop.f32.mrf.mxu0
      %v825 = vadd.f32 %v736, %v824
      %v826 = vpop.f32.mrf.mxu0
      %v827 = vadd.f32 %v738, %v826
      %828 = vmatmul.bf16.gmra.mxu0 %v659
      %v829 = vpop.f32.mrf.mxu0
      %v830 = vadd.f32 %v741, %v829
      %v831 = vpop.f32.mrf.mxu0
      %v832 = vadd.f32 %v743, %v831
      %833 = vmatmul.bf16.gmra.mxu0 %v662
      %v834 = vpop.f32.mrf.mxu0
      %v835 = vadd.f32 %v746, %v834
      %v836 = vpop.f32.mrf.mxu0
      %v837 = vadd.f32 %v748, %v836
      %838 = vmatmul.bf16.gmra.mxu0 %v665
      %v839 = vpop.f32.mrf.mxu0
      %v840 = vadd.f32 %v751, %v839
      %v841 = vpop.f32.mrf.mxu0
      %v842 = vadd.f32 %v753, %v841
      %843 = vmatmul.bf16.gmra.mxu0 %v668
      %v844 = vpop.f32.mrf.mxu0
      %v845 = vadd.f32 %v756, %v844
      %v846 = vpop.f32.mrf.mxu0
      %v847 = vadd.f32 %v758, %v846
      %848 = vmatmul.bf16.gmra.mxu0 %v671
      %v849 = vpop.f32.mrf.mxu0
      %v850 = vadd.f32 %v761, %v849
      %v851 = vpop.f32.mrf.mxu0
      %v852 = vadd.f32 %v763, %v851
      %853 = vmatmul.bf16.gmra.mxu0 %v674
      %v854 = vpop.f32.mrf.mxu0
      %v855 = vadd.f32 %v766, %v854
      %v856 = vpop.f32.mrf.mxu0
      %v857 = vadd.f32 %v768, %v856
      %858 = vmatmul.bf16.gmra.mxu0 %v677
      %v859 = vpop.f32.mrf.mxu0
      %v860 = vadd.f32 %v771, %v859
      %v861 = vpop.f32.mrf.mxu0
      %v862 = vadd.f32 %v773, %v861
      %863 = vdwg.mxu0
      %v864 = vadd.f32 %v346, %v785
      %v865 = vadd.f32 %v347, %v787
      %v866 = vadd.f32 %v348, %v790
      %v867 = vadd.f32 %v349, %v792
      %v868 = vadd.f32 %v350, %v795
      %v869 = vadd.f32 %v351, %v797
      %v870 = vadd.f32 %v352, %v800
      %v871 = vadd.f32 %v353, %v802
      %v872 = vadd.f32 %v354, %v805
      %v873 = vadd.f32 %v355, %v807
      %v874 = vadd.f32 %v356, %v810
      %v875 = vadd.f32 %v357, %v812
      %v876 = vadd.f32 %v358, %v815
      %v877 = vadd.f32 %v359, %v817
      %v878 = vadd.f32 %v360, %v820
      %v879 = vadd.f32 %v361, %v822
      %v880 = vadd.f32 %v362, %v825
      %v881 = vadd.f32 %v363, %v827
      %v882 = vadd.f32 %v364, %v830
      %v883 = vadd.f32 %v365, %v832
      %v884 = vadd.f32 %v366, %v835
      %v885 = vadd.f32 %v367, %v837
      %v886 = vadd.f32 %v368, %v840
      %v887 = vadd.f32 %v369, %v842
      %v888 = vadd.f32 %v370, %v845
      %v889 = vadd.f32 %v371, %v847
      %v890 = vadd.f32 %v372, %v850
      %v891 = vadd.f32 %v373, %v852
      %v892 = vadd.f32 %v374, %v855
      %v893 = vadd.f32 %v375, %v857
      %v894 = vadd.f32 %v376, %v860
      %v895 = vadd.f32 %v377, %v862
      %vm896 = vcmask 523264
      %897 = vst.msk [vmem:[#allocation2] sm:$0xff] %vm896, %v864
      %898 = vst.msk [vmem:[#allocation2 + $0x8] sm:$0xff] %vm896, %v865
      %899 = vst.msk [vmem:[#allocation2 + $0x10] sm:$0xff] %vm896, %v866
      %900 = vst.msk [vmem:[#allocation2 + $0x18] sm:$0xff] %vm896, %v867
      %901 = vst.msk [vmem:[#allocation2 + $0x20] sm:$0xff] %vm896, %v868
      %902 = vst.msk [vmem:[#allocation2 + $0x28] sm:$0xff] %vm896, %v869
      %903 = vst.msk [vmem:[#allocation2 + $0x30] sm:$0xff] %vm896, %v870
      %904 = vst.msk [vmem:[#allocation2 + $0x38] sm:$0xff] %vm896, %v871
      %905 = vst.msk [vmem:[#allocation2 + $0x40] sm:$0xff] %vm896, %v872
      %906 = vst.msk [vmem:[#allocation2 + $0x48] sm:$0xff] %vm896, %v873
      %907 = vst.msk [vmem:[#allocation2 + $0x50] sm:$0xff] %vm896, %v874
      %908 = vst.msk [vmem:[#allocation2 + $0x58] sm:$0xff] %vm896, %v875
      %909 = vst.msk [vmem:[#allocation2 + $0x60] sm:$0xff] %vm896, %v876
      %910 = vst.msk [vmem:[#allocation2 + $0x68] sm:$0xff] %vm896, %v877
      %911 = vst.msk [vmem:[#allocation2 + $0x70] sm:$0xff] %vm896, %v878
      %912 = vst.msk [vmem:[#allocation2 + $0x78] sm:$0xff] %vm896, %v879
      %913 = vst.msk [vmem:[#allocation2 + $0x80] sm:$0xff] %vm896, %v880
      %914 = vst.msk [vmem:[#allocation2 + $0x88] sm:$0xff] %vm896, %v881
      %915 = vst.msk [vmem:[#allocation2 + $0x90] sm:$0xff] %vm896, %v882
      %916 = vst.msk [vmem:[#allocation2 + $0x98] sm:$0xff] %vm896, %v883
      %917 = vst.msk [vmem:[#allocation2 + $0xa0] sm:$0xff] %vm896, %v884
      %918 = vst.msk [vmem:[#allocation2 + $0xa8] sm:$0xff] %vm896, %v885
      %919 = vst.msk [vmem:[#allocation2 + $0xb0] sm:$0xff] %vm896, %v886
      %920 = vst.msk [vmem:[#allocation2 + $0xb8] sm:$0xff] %vm896, %v887
      %921 = vst.msk [vmem:[#allocation2 + $0xc0] sm:$0xff] %vm896, %v888
      %922 = vst.msk [vmem:[#allocation2 + $0xc8] sm:$0xff] %vm896, %v889
      %923 = vst.msk [vmem:[#allocation2 + $0xd0] sm:$0xff] %vm896, %v890
      %924 = vst.msk [vmem:[#allocation2 + $0xd8] sm:$0xff] %vm896, %v891
      %925 = vst.msk [vmem:[#allocation2 + $0xe0] sm:$0xff] %vm896, %v892
      %926 = vst.msk [vmem:[#allocation2 + $0xe8] sm:$0xff] %vm896, %v893
      %927 = vst.msk [vmem:[#allocation2 + $0xf0] sm:$0xff] %vm896, %v894
      %928 = vst.msk [vmem:[#allocation2 + $0xf8] sm:$0xff] %vm896, %v895
      // Predicated region
      $region41: #{_stem_check.1} parent=35 // pred_check
        %p929 = pneg %p309
      $region42: #{_stem_check.1} parent=35 // pred_check_branch
        %931 = sbr.rel (%p929) target = $region44
      $region43: #{_stem_check.1} parent=35 // pred_region
        %v932 = vld [vmem:[#allocation2] sm:$0xff]
        %v933 = vld [vmem:[#allocation2 + $0x8] sm:$0xff]
        %v934 = vld [vmem:[#allocation2 + $0x10] sm:$0xff]
        %v935 = vld [vmem:[#allocation2 + $0x18] sm:$0xff]
        %v936 = vld [vmem:[#allocation2 + $0x20] sm:$0xff]
        %v937 = vld [vmem:[#allocation2 + $0x28] sm:$0xff]
        %v938 = vld [vmem:[#allocation2 + $0x30] sm:$0xff]
        %v939 = vld [vmem:[#allocation2 + $0x38] sm:$0xff]
        %v940 = vld [vmem:[#allocation2 + $0x40] sm:$0xff]
        %v941 = vld [vmem:[#allocation2 + $0x48] sm:$0xff]
        %v942 = vld [vmem:[#allocation2 + $0x50] sm:$0xff]
        %v943 = vld [vmem:[#allocation2 + $0x58] sm:$0xff]
        %v944 = vld [vmem:[#allocation2 + $0x60] sm:$0xff]
        %v945 = vld [vmem:[#allocation2 + $0x68] sm:$0xff]
        %v946 = vld [vmem:[#allocation2 + $0x70] sm:$0xff]
        %v947 = vld [vmem:[#allocation2 + $0x78] sm:$0xff]
        %v948 = vld [vmem:[#allocation2 + $0x80] sm:$0xff]
        %v949 = vld [vmem:[#allocation2 + $0x88] sm:$0xff]
        %v950 = vld [vmem:[#allocation2 + $0x90] sm:$0xff]
        %v951 = vld [vmem:[#allocation2 + $0x98] sm:$0xff]
        %v952 = vld [vmem:[#allocation2 + $0xa0] sm:$0xff]
        %v953 = vld [vmem:[#allocation2 + $0xa8] sm:$0xff]
        %v954 = vld [vmem:[#allocation2 + $0xb0] sm:$0xff]
        %v955 = vld [vmem:[#allocation2 + $0xb8] sm:$0xff]
        %v956 = vld [vmem:[#allocation2 + $0xc0] sm:$0xff]
        %v957 = vld [vmem:[#allocation2 + $0xc8] sm:$0xff]
        %v958 = vld [vmem:[#allocation2 + $0xd0] sm:$0xff]
        %v959 = vld [vmem:[#allocation2 + $0xd8] sm:$0xff]
        %v960 = vld [vmem:[#allocation2 + $0xe0] sm:$0xff]
        %v961 = vld [vmem:[#allocation2 + $0xe8] sm:$0xff]
        %v962 = vld [vmem:[#allocation2 + $0xf0] sm:$0xff]
        %v963 = vld [vmem:[#allocation2 + $0xf8] sm:$0xff]
        %v964 = vld [vmem:[%s295] sm:$0x1]
        %v966 = vperm.slane %v964, 0
        %v968 = vmul.f32 %v932, %v966
        %v969 = vmul.f32 %v933, %v966
        %v970 = vmul.f32 %v934, %v966
        %v971 = vmul.f32 %v935, %v966
        %v972 = vmul.f32 %v936, %v966
        %v973 = vmul.f32 %v937, %v966
        %v974 = vmul.f32 %v938, %v966
        %v975 = vmul.f32 %v939, %v966
        %v976 = vmul.f32 %v940, %v966
        %v977 = vmul.f32 %v941, %v966
        %v978 = vmul.f32 %v942, %v966
        %v979 = vmul.f32 %v943, %v966
        %v980 = vmul.f32 %v944, %v966
        %v981 = vmul.f32 %v945, %v966
        %v982 = vmul.f32 %v946, %v966
        %v983 = vmul.f32 %v947, %v966
        %v984 = vmul.f32 %v948, %v966
        %v985 = vmul.f32 %v949, %v966
        %v986 = vmul.f32 %v950, %v966
        %v987 = vmul.f32 %v951, %v966
        %v988 = vmul.f32 %v952, %v966
        %v989 = vmul.f32 %v953, %v966
        %v990 = vmul.f32 %v954, %v966
        %v991 = vmul.f32 %v955, %v966
        %v992 = vmul.f32 %v956, %v966
        %v993 = vmul.f32 %v957, %v966
        %v994 = vmul.f32 %v958, %v966
        %v995 = vmul.f32 %v959, %v966
        %v996 = vmul.f32 %v960, %v966
        %v997 = vmul.f32 %v961, %v966
        %v998 = vmul.f32 %v962, %v966
        %v999 = vmul.f32 %v963, %v966
        %v1000 = vld [vmem:[%s298] sm:$0x1]
        %v1002 = vperm.slane %v1000, 0
        %v1004 = vadd.f32 %v968, %v1002
        %v1005 = vadd.f32 %v969, %v1002
        %v1006 = vadd.f32 %v970, %v1002
        %v1007 = vadd.f32 %v971, %v1002
        %v1008 = vadd.f32 %v972, %v1002
        %v1009 = vadd.f32 %v973, %v1002
        %v1010 = vadd.f32 %v974, %v1002
        %v1011 = vadd.f32 %v975, %v1002
        %v1012 = vadd.f32 %v976, %v1002
        %v1013 = vadd.f32 %v977, %v1002
        %v1014 = vadd.f32 %v978, %v1002
        %v1015 = vadd.f32 %v979, %v1002
        %v1016 = vadd.f32 %v980, %v1002
        %v1017 = vadd.f32 %v981, %v1002
        %v1018 = vadd.f32 %v982, %v1002
        %v1019 = vadd.f32 %v983, %v1002
        %v1020 = vadd.f32 %v984, %v1002
        %v1021 = vadd.f32 %v985, %v1002
        %v1022 = vadd.f32 %v986, %v1002
        %v1023 = vadd.f32 %v987, %v1002
        %v1024 = vadd.f32 %v988, %v1002
        %v1025 = vadd.f32 %v989, %v1002
        %v1026 = vadd.f32 %v990, %v1002
        %v1027 = vadd.f32 %v991, %v1002
        %v1028 = vadd.f32 %v992, %v1002
        %v1029 = vadd.f32 %v993, %v1002
        %v1030 = vadd.f32 %v994, %v1002
        %v1031 = vadd.f32 %v995, %v1002
        %v1032 = vadd.f32 %v996, %v1002
        %v1033 = vadd.f32 %v997, %v1002
        %v1034 = vadd.f32 %v998, %v1002
        %v1035 = vadd.f32 %v999, %v1002
        %v1036 = vmax.f32 %v1004, 0.0
        %v1037 = vmax.f32 %v1005, 0.0
        %v1038 = vmax.f32 %v1006, 0.0
        %v1039 = vmax.f32 %v1007, 0.0
        %v1040 = vmax.f32 %v1008, 0.0
        %v1041 = vmax.f32 %v1009, 0.0
        %v1042 = vmax.f32 %v1010, 0.0
        %v1043 = vmax.f32 %v1011, 0.0
        %v1044 = vmax.f32 %v1012, 0.0
        %v1045 = vmax.f32 %v1013, 0.0
        %v1046 = vmax.f32 %v1014, 0.0
        %v1047 = vmax.f32 %v1015, 0.0
        %v1048 = vmax.f32 %v1016, 0.0
        %v1049 = vmax.f32 %v1017, 0.0
        %v1050 = vmax.f32 %v1018, 0.0
        %v1051 = vmax.f32 %v1019, 0.0
        %v1052 = vmax.f32 %v1020, 0.0
        %v1053 = vmax.f32 %v1021, 0.0
        %v1054 = vmax.f32 %v1022, 0.0
        %v1055 = vmax.f32 %v1023, 0.0
        %v1056 = vmax.f32 %v1024, 0.0
        %v1057 = vmax.f32 %v1025, 0.0
        %v1058 = vmax.f32 %v1026, 0.0
        %v1059 = vmax.f32 %v1027, 0.0
        %v1060 = vmax.f32 %v1028, 0.0
        %v1061 = vmax.f32 %v1029, 0.0
        %v1062 = vmax.f32 %v1030, 0.0
        %v1063 = vmax.f32 %v1031, 0.0
        %v1064 = vmax.f32 %v1032, 0.0
        %v1065 = vmax.f32 %v1033, 0.0
        %v1066 = vmax.f32 %v1034, 0.0
        %v1067 = vmax.f32 %v1035, 0.0
        %v1068 = vpack.c.bf16 %v1036, %v1036
        %v1069 = vpack.c.bf16 %v1037, %v1037
        %v1070 = vpack.c.bf16 %v1038, %v1038
        %v1071 = vpack.c.bf16 %v1039, %v1039
        %v1072 = vpack.c.bf16 %v1040, %v1040
        %v1073 = vpack.c.bf16 %v1041, %v1041
        %v1074 = vpack.c.bf16 %v1042, %v1042
        %v1075 = vpack.c.bf16 %v1043, %v1043
        %v1076 = vpack.c.bf16 %v1044, %v1044
        %v1077 = vpack.c.bf16 %v1045, %v1045
        %v1078 = vpack.c.bf16 %v1046, %v1046
        %v1079 = vpack.c.bf16 %v1047, %v1047
        %v1080 = vpack.c.bf16 %v1048, %v1048
        %v1081 = vpack.c.bf16 %v1049, %v1049
        %v1082 = vpack.c.bf16 %v1050, %v1050
        %v1083 = vpack.c.bf16 %v1051, %v1051
        %v1084 = vpack.c.bf16 %v1052, %v1052
        %v1085 = vpack.c.bf16 %v1053, %v1053
        %v1086 = vpack.c.bf16 %v1054, %v1054
        %v1087 = vpack.c.bf16 %v1055, %v1055
        %v1088 = vpack.c.bf16 %v1056, %v1056
        %v1089 = vpack.c.bf16 %v1057, %v1057
        %v1090 = vpack.c.bf16 %v1058, %v1058
        %v1091 = vpack.c.bf16 %v1059, %v1059
        %v1092 = vpack.c.bf16 %v1060, %v1060
        %v1093 = vpack.c.bf16 %v1061, %v1061
        %v1094 = vpack.c.bf16 %v1062, %v1062
        %v1095 = vpack.c.bf16 %v1063, %v1063
        %v1096 = vpack.c.bf16 %v1064, %v1064
        %v1097 = vpack.c.bf16 %v1065, %v1065
        %v1098 = vpack.c.bf16 %v1066, %v1066
        %v1099 = vpack.c.bf16 %v1067, %v1067
        %vm1100 = vcmask 519168
        %1101 = vst.msk [vmem:[%s306] sm:$0xf] %vm1100, %v1068
        %1102 = vst.msk [vmem:[%s306 + $0x4] sm:$0xf] %vm1100, %v1069
        %1103 = vst.msk [vmem:[%s306 + $0x8] sm:$0xf] %vm1100, %v1070
        %1104 = vst.msk [vmem:[%s306 + $0xc] sm:$0xf] %vm1100, %v1071
        %1105 = vst.msk [vmem:[%s306 + $0x10] sm:$0xf] %vm1100, %v1072
        %1106 = vst.msk [vmem:[%s306 + $0x14] sm:$0xf] %vm1100, %v1073
        %1107 = vst.msk [vmem:[%s306 + $0x18] sm:$0xf] %vm1100, %v1074
        %1108 = vst.msk [vmem:[%s306 + $0x1c] sm:$0xf] %vm1100, %v1075
        %1109 = vst.msk [vmem:[%s306 + $0x20] sm:$0xf] %vm1100, %v1076
        %1110 = vst.msk [vmem:[%s306 + $0x24] sm:$0xf] %vm1100, %v1077
        %1111 = vst.msk [vmem:[%s306 + $0x28] sm:$0xf] %vm1100, %v1078
        %1112 = vst.msk [vmem:[%s306 + $0x2c] sm:$0xf] %vm1100, %v1079
        %1113 = vst.msk [vmem:[%s306 + $0x30] sm:$0xf] %vm1100, %v1080
        %1114 = vst.msk [vmem:[%s306 + $0x34] sm:$0xf] %vm1100, %v1081
        %1115 = vst.msk [vmem:[%s306 + $0x38] sm:$0xf] %vm1100, %v1082
        %1116 = vst.msk [vmem:[%s306 + $0x3c] sm:$0xf] %vm1100, %v1083
        %1117 = vst.msk [vmem:[%s306 + $0x40] sm:$0xf] %vm1100, %v1084
        %1118 = vst.msk [vmem:[%s306 + $0x44] sm:$0xf] %vm1100, %v1085
        %1119 = vst.msk [vmem:[%s306 + $0x48] sm:$0xf] %vm1100, %v1086
        %1120 = vst.msk [vmem:[%s306 + $0x4c] sm:$0xf] %vm1100, %v1087
        %1121 = vst.msk [vmem:[%s306 + $0x50] sm:$0xf] %vm1100, %v1088
        %1122 = vst.msk [vmem:[%s306 + $0x54] sm:$0xf] %vm1100, %v1089
        %1123 = vst.msk [vmem:[%s306 + $0x58] sm:$0xf] %vm1100, %v1090
        %1124 = vst.msk [vmem:[%s306 + $0x5c] sm:$0xf] %vm1100, %v1091
        %1125 = vst.msk [vmem:[%s306 + $0x60] sm:$0xf] %vm1100, %v1092
        %1126 = vst.msk [vmem:[%s306 + $0x64] sm:$0xf] %vm1100, %v1093
        %1127 = vst.msk [vmem:[%s306 + $0x68] sm:$0xf] %vm1100, %v1094
        %1128 = vst.msk [vmem:[%s306 + $0x6c] sm:$0xf] %vm1100, %v1095
        %1129 = vst.msk [vmem:[%s306 + $0x70] sm:$0xf] %vm1100, %v1096
        %1130 = vst.msk [vmem:[%s306 + $0x74] sm:$0xf] %vm1100, %v1097
        %1131 = vst.msk [vmem:[%s306 + $0x78] sm:$0xf] %vm1100, %v1098
        %1132 = vst.msk [vmem:[%s306 + $0x7c] sm:$0xf] %vm1100, %v1099
      $region44: #{_stem_check.1} parent=35 // pred_fallthru
        _
      %s1133 = smul.u32 32, %s20
      %p1134 = scmp.lt.s32.totalorder %s1133, 255
      %s1135 = scalar_select %p1134, %s1133, 255
      %p1136 = scmp.lt.s32.totalorder %s21, 0
      %s1137 = scalar_select %p1136, %s21, 0
      %s1138 = sadd.s32 %s1137, %s1135
      %s1139 = smul.addr %s1138, 4
      %s1140 = scalar_lea.vmem %s4, %s1139
      // Predicated region
      $region45: #{_stem_check.1} parent=35 // pred_check
        %p1141 = pneg %p162
      $region46: #{_stem_check.1} parent=35 // pred_check_branch
        %1143 = sbr.rel (%p1141) target = $region48
      $region47: #{_stem_check.1} parent=35 // pred_region
        %s1144 = smul.u32 32, %s20
      $region48: #{_stem_check.1} parent=35 // pred_fallthru
        _
    $region36: #{_stem_check.1} parent=5 // pred_fallthru
      _
    %p1145 = scmp.le.s32.totalorder 2, %s10
    // Predicated region
    $region49: #{_stem_check.1} parent=5 // pred_check
      %p1146 = pneg %p1145
    $region50: #{_stem_check.1} parent=5 // pred_check_branch
      %1148 = sbr.rel (%p1146) target = $region52
    $region51: #{_stem_check.1} parent=5 // pred_region
      %s1149 = ssub.s32 %s10, 2
      // Predicated region
      $region53: #{_stem_check.1} parent=51 // pred_check
        %p1150 = pneg %p168
      $region54: #{_stem_check.1} parent=51 // pred_check_branch
        %1152 = sbr.rel (%p1150) target = $region56
      $region55: #{_stem_check.1} parent=51 // pred_region
        %s1153 = smul.u32 32, %s23
        %p1154 = scmp.lt.s32.totalorder %s1153, 255
        %s1155 = scalar_select %p1154, %s1153, 255
        %p1156 = scmp.lt.s32.totalorder %s24, 0
        %s1157 = scalar_select %p1156, %s24, 0
        %s1158 = sadd.s32 %s1157, %s1155
        %s1159 = smul.addr %s1158, 4
        %s1160 = scalar_lea.vmem %s4, %s1159
      $region56: #{_stem_check.1} parent=51 // pred_fallthru
        _
    $region52: #{_stem_check.1} parent=5 // pred_fallthru
      _
  $region6: #{_stem_check.1} parent=0 // loop_footer
    %s14 = sadd.s32 1, %s10
  $region7: #{_stem_check.1} parent=0 // loop_footer_branch
    %9 = sbr.rel target = $region3
  $region8: #{_stem_check.1} parent=0 // loop_exit
    _

</llo_original>
